<compile_context>
chip_gen: v6e
topology: v6e:2x2x1
jax: 0.10.0
libtpu: 0.0.40
codegen_flags: <defaults>
</compile_context>

<pallas_src>
import functools

import jax
import jax.numpy as jnp
from jax.experimental import pallas as pl
from jax.experimental.pallas import tpu as pltpu


# ---------------------------------------------------------------------------
# Kernel
# ---------------------------------------------------------------------------
def _fused_linear_softmax_kernel(x_ref, w_ref, b_ref, s_ref, o_ref, *,
                                 approx_recip=True):
    """o = softmax((x @ W) * scale + b, axis=-1); D tiles on grid axis 1."""
    d = pl.program_id(1)

    xv = x_ref[...]
    wv = w_ref[...]
    if wv.dtype == jnp.int8:
        # int8 weight streaming: per-tile VPU dequant to f32; the per-class
        # scale is applied once in the epilogue (mathematically exact).
        wv = wv.astype(jnp.float32)
    compute_dtype = jnp.bfloat16 if wv.dtype == jnp.bfloat16 else jnp.float32
    partial = jnp.dot(xv.astype(compute_dtype), wv.astype(compute_dtype),
                      preferred_element_type=jnp.float32)

    @pl.when(d == 0)
    def _first():
        # Direct store on the first reduction step: no zero-init pass, no
        # redundant VMEM read-modify-write.
        o_ref[...] = partial

    @pl.when(d > 0)
    def _accumulate():
        o_ref[...] += partial

    @pl.when(d == pl.num_programs(1) - 1)
    def _epilogue():
        logits = o_ref[...] * s_ref[...] + b_ref[...]      # (TB,K)*(1,K)+(1,K)
        m = jnp.max(logits, axis=-1, keepdims=True)
        e = jnp.exp(logits - m)
        denom = jnp.sum(e, axis=-1, keepdims=True)
        if approx_recip:
            probs = e * pl.reciprocal(denom, approx=True)  # EUP slot, ~free
        else:
            probs = e / denom                              # exact normalization
        o_ref[...] = probs.astype(o_ref.dtype)


# ---------------------------------------------------------------------------
# VMEM budgeting & tile selection
# ---------------------------------------------------------------------------
def _vmem_budgets():
    """Generation-aware (block_budget_bytes, vmem_limit_bytes)."""
    try:
        cap = int(pltpu.get_tpu_info().vmem_capacity_bytes)
    except Exception:
        cap = 64 * 1024 * 1024          # conservative fallback (v7x-sized)
    block_budget = max(16 << 20, int(cap * 0.45))
    vmem_limit = max(min(int(cap * 0.75), cap - (8 << 20)), 24 << 20)
    return block_budget, vmem_limit


def _pick_tiles(B, D, Kp, x_item, w_item, budget_bytes):
    """Jointly pick (TB, TD) so the double-buffered x and W blocks, the
    resident f32 accumulator and the bias/scale rows all fit one VMEM budget.

    Preference order:
      1. avoid re-streaming W across batch tiles (n_b > 1 AND n_d > 1),
      2. fewer grid steps (~0.35 us/step overhead),
      3. larger TB, then larger TD.
    """
    def need(tb, td):
        return (2 * tb * td * x_item        # double-buffered x tile
                + 2 * td * Kp * w_item      # double-buffered W tile
                + 4 * Kp * 4                # bias + scale rows (resident)
                + 2 * tb * Kp * 4)          # resident f32 output/accumulator

    tbs = [B] + [t for t in (2048, 1024, 512, 256, 128, 64, 32, 16, 8)
                 if t < B and B % t == 0]
    tds = [D] + [t for t in (32768, 16384, 8192, 4096, 2048, 1024, 512, 256, 128)
                 if t < D and D % t == 0]

    best = None
    for td in tds:
        for tb in tbs:
            if need(tb, td) > budget_bytes:
                continue
            n_b, n_d = B // tb, D // td
            restream = n_b if n_d > 1 else 1   # times W is re-read from HBM
            key = (restream, n_b * n_d, -tb, -td)
            if best is None or key < best[0]:
                best = (key, (tb, td))
    if best is None:
        return tbs[-1], tds[-1]                # smallest tiles; best effort
    return best[1]


def _pad_axis(a, axis, multiple, value=0.0):
    pad = (-a.shape[axis]) % multiple
    if pad == 0:
        return a
    widths = [(0, 0)] * a.ndim
    widths[axis] = (0, pad)
    return jnp.pad(a, widths, constant_values=value)


# ---------------------------------------------------------------------------
# Parameter folding (ensemble of linear members -> one matmul)
# ---------------------------------------------------------------------------
def fold_ensemble_params(weights, biases, stream_dtype=jnp.float32):
    """sum_m (x @ W_m + b_m) == x @ W_sum + b_sum  (exact for linear members).

    weights: [M, D, K], biases: [M, 1, K]  ->  (W_stream, b_sum[1,K] f32,
    scale[1,K] f32).  stream_dtype:
      float32 / bfloat16 : W_stream = W_sum cast, scale = 1
      int8               : per-class symmetric quantization; scale is folded
                           into the kernel epilogue (quarter HBM weight bytes)
    With static weights this fold/quantization runs once and is amortized.
    """
    w_sum = jnp.sum(weights.astype(jnp.float32), axis=0)            # [D, K]
    b_sum = jnp.sum(biases.astype(jnp.float32), axis=0).reshape(1, -1)
    K = w_sum.shape[1]
    if jnp.dtype(stream_dtype) == jnp.dtype(jnp.int8):
        amax = jnp.max(jnp.abs(w_sum), axis=0, keepdims=True)       # [1, K]
        scale = jnp.where(amax > 0, amax / 127.0, 1.0).astype(jnp.float32)
        w_q = jnp.clip(jnp.round(w_sum / scale), -127, 127).astype(jnp.int8)
        return w_q, b_sum, scale
    return w_sum.astype(stream_dtype), b_sum, jnp.ones((1, K), jnp.float32)


# ---------------------------------------------------------------------------
# Forward wrapper
# ---------------------------------------------------------------------------
def ensemble_forward(x_nchw, w_sum, b_sum, scale, *, approx_recip=True):
    """softmax((flatten(x) @ W_sum) * scale + b_sum, axis=-1) -> [B, K] f32."""
    B = x_nchw.shape[0]
    D, K = w_sum.shape

    # Flatten; keep x in its input dtype.  Any narrowing happens in-kernel
    # right before the dot (no separate wrapper-side HBM cast pass).
    x_flat = x_nchw.reshape(B, D)

    # Pad D to a multiple of 128 (zero rows are exact) and K to a multiple of
    # 128 (padded classes get bias -1e30 -> probability 0, real probs exact).
    x_flat = _pad_axis(x_flat, 1, 128)
    w_p = _pad_axis(_pad_axis(w_sum, 0, 128), 1, 128)
    b_p = _pad_axis(b_sum, 1, 128, value=-1e30)
    s_p = _pad_axis(scale, 1, 128, value=1.0)
    Dp, Kp = w_p.shape

    x_item = jnp.dtype(x_flat.dtype).itemsize
    w_item = jnp.dtype(w_p.dtype).itemsize
    block_budget, vmem_limit = _vmem_budgets()
    TB, TD = _pick_tiles(B, Dp, Kp, x_item, w_item, block_budget)
    n_b, n_d = B // TB, Dp // TD

    kernel = functools.partial(_fused_linear_softmax_kernel,
                               approx_recip=approx_recip)

    # NOTE: tuning knobs not enabled by default — pipeline_mode=pl.Buffered(3)
    # on the W/x specs (only useful when n_d >= 3 and the budget allows), and a
    # "parallel" K grid axis for very large class counts.
    grid_spec = pltpu.PrefetchScalarGridSpec(
        num_scalar_prefetch=0,
        grid=(n_b, n_d),                                    # reduction axis last
        in_specs=[
            pl.BlockSpec((TB, TD), lambda b, d: (b, d)),    # x tile
            pl.BlockSpec((TD, Kp), lambda b, d: (d, 0)),    # W tile (lane-dense K)
            pl.BlockSpec((1, Kp), lambda b, d: (0, 0)),     # bias (resident)
            pl.BlockSpec((1, Kp), lambda b, d: (0, 0)),     # per-class scale
        ],
        out_specs=pl.BlockSpec((TB, Kp), lambda b, d: (b, 0)),  # resident acc
    )

    out = pl.pallas_call(
        kernel,
        out_shape=jax.ShapeDtypeStruct((B, Kp), jnp.float32),
        grid_spec=grid_spec,
        compiler_params=pltpu.CompilerParams(
            dimension_semantics=("parallel", "arbitrary"),
            vmem_limit_bytes=int(vmem_limit),
        ),
    )(x_flat, w_p, b_p, s_p)
    return out[:, :K] if Kp != K else out


# ---------------------------------------------------------------------------
# Pure-JAX reference of the original PyTorch Ensemble
# ---------------------------------------------------------------------------
def ensemble_reference(x_nchw, weights, biases):
    B = x_nchw.shape[0]
    M, D, K = weights.shape
    x_flat = x_nchw.reshape(B, D)
    preds = x_flat @ weights[0] + biases[0]
    for m in range(1, M):
        preds = preds + (x_flat @ weights[m] + biases[m])
    return jax.nn.softmax(preds, axis=1)


if __name__ == "__main__":
    key = jax.random.PRNGKey(0)
    B, C, H, W = 2, 4, 16, 16          # input: NCHW
    M = 3                              # number of ensemble members
    D = C * H * W                      # flattened feature dim = 1024
    K = 128                            # number of classes (lane-dense)

    kx, kw, kb = jax.random.split(key, 3)
    x = jax.random.normal(kx, (B, C, H, W), dtype=jnp.float32)
    weights = jax.random.normal(kw, (M, D, K), dtype=jnp.float32) * 0.02
    biases = jax.random.normal(kb, (M, 1, K), dtype=jnp.float32) * 0.1

    ref = ensemble_reference(x, weights, biases)

    # f32 weight streaming: validates the fold + fused matmul + softmax math.
    w32, b32, s32 = fold_ensemble_params(weights, biases, jnp.float32)
    out32 = jax.block_until_ready(ensemble_forward(x, w32, b32, s32))
    assert out32.shape == (B, K)
    assert jnp.allclose(out32, ref, atol=5e-3, rtol=5e-3), "f32 path mismatch"
    assert jnp.allclose(jnp.sum(out32, axis=1), 1.0, atol=1e-2), "rows must sum to ~1"

    # bf16 weight streaming (half HBM weight bytes; in-kernel x narrowing,
    # f32 MXU accumulation).
    wbf, bbf, sbf = fold_ensemble_params(weights, biases, jnp.bfloat16)
    outbf = jax.block_until_ready(ensemble_forward(x, wbf, bbf, sbf))
    assert outbf.shape == (B, K)
    assert jnp.allclose(outbf, ref, atol=2.5e-2, rtol=2.5e-2), "bf16 path mismatch"

    # int8 weight streaming with per-class scale (quarter HBM weight bytes).
    w8, b8, s8 = fold_ensemble_params(weights, biases, jnp.int8)
    out8 = jax.block_until_ready(ensemble_forward(x, w8, b8, s8))
    assert out8.shape == (B, K)
    assert jnp.allclose(out8, ref, atol=5e-2), "int8 path mismatch"
    assert jnp.allclose(jnp.sum(out8, axis=1), 1.0, atol=1e-2), "rows must sum to ~1"

    print("KERNEL_OK")
</pallas_src>

<mosaic_0001>
module attributes {stable_mosaic.version = 11 : i64} {
  func.func @_fused_linear_softmax_kernel(%arg0: i32, %arg1: i32, %arg2: memref<2x1024xf32, #tpu.memory_space<vmem>>, %arg3: memref<1024x128xf32, #tpu.memory_space<vmem>>, %arg4: memref<1x128xf32, #tpu.memory_space<vmem>>, %arg5: memref<1x128xf32, #tpu.memory_space<vmem>>, %arg6: memref<2x128xf32, #tpu.memory_space<vmem>>) attributes {dimension_semantics = [#tpu.dimension_semantics<parallel>, #tpu.dimension_semantics<arbitrary>], iteration_bounds = array<i64: 1, 1>, scalar_prefetch = 0 : i64, scratch_operands = 0 : i64, tpu.core_type = #tpu.core_type<tc>, window_params = [{transform_indices = @transform_0, window_bounds = array<i64: 2, 1024>}, {transform_indices = @transform_1, window_bounds = array<i64: 1024, 128>}, {pipeline_mode = #tpu.pipeline_mode<synchronous>, transform_indices = @transform_2, window_bounds = array<i64: 1, 128>}, {pipeline_mode = #tpu.pipeline_mode<synchronous>, transform_indices = @transform_3, window_bounds = array<i64: 1, 128>}, {transform_indices = @transform_4, window_bounds = array<i64: 2, 128>}]} {
    %c0 = arith.constant 0 : index
    %c0_0 = arith.constant 0 : index
    %0 = vector.load %arg2[%c0, %c0_0] : memref<2x1024xf32, #tpu.memory_space<vmem>>, vector<2x1024xf32>
    %c0_1 = arith.constant 0 : index
    %c0_2 = arith.constant 0 : index
    %1 = vector.load %arg3[%c0_1, %c0_2] : memref<1024x128xf32, #tpu.memory_space<vmem>>, vector<1024x128xf32>
    %cst = arith.constant dense<0.000000e+00> : vector<2x128xf32>
    %2 = tpu.matmul %0, %1, %cst {dimension_numbers = #tpu.dot_dimension_numbers<[1], [0], [0], [1], [0, 0, 1, 1], [], []>} : vector<2x1024xf32>, vector<1024x128xf32>, vector<2x128xf32> -> vector<2x128xf32>
    %c0_i32 = arith.constant 0 : i32
    %3 = arith.cmpi eq, %arg1, %c0_i32 : i32
    %4 = arith.extui %3 : i1 to i32
    %c0_i32_3 = arith.constant 0 : i32
    %5 = arith.cmpi ne, %4, %c0_i32_3 : i32
    scf.if %5 {
      %c0_8 = arith.constant 0 : index
      %c0_9 = arith.constant 0 : index
      %12 = vector.load %arg6[%c0_8, %c0_9] : memref<2x128xf32, #tpu.memory_space<vmem>>, vector<2x128xf32>
      tpu.vector_store %arg6[%c0_8, %c0_9], %2 {strides = array<i32>} : memref<2x128xf32, #tpu.memory_space<vmem>>, vector<2x128xf32>,
    } else {
    }
    %c0_i32_4 = arith.constant 0 : i32
    %6 = arith.cmpi sgt, %arg1, %c0_i32_4 : i32
    %7 = arith.extui %6 : i1 to i32
    %c0_i32_5 = arith.constant 0 : i32
    %8 = arith.cmpi ne, %7, %c0_i32_5 : i32
    scf.if %8 {
      %c0_8 = arith.constant 0 : index
      %c0_9 = arith.constant 0 : index
      %12 = vector.load %arg6[%c0_8, %c0_9] : memref<2x128xf32, #tpu.memory_space<vmem>>, vector<2x128xf32>
      %13 = arith.addf %12, %2 : vector<2x128xf32>
      %c0_10 = arith.constant 0 : index
      %c0_11 = arith.constant 0 : index
      %14 = vector.load %arg6[%c0_10, %c0_11] : memref<2x128xf32, #tpu.memory_space<vmem>>, vector<2x128xf32>
      tpu.vector_store %arg6[%c0_10, %c0_11], %13 {strides = array<i32>} : memref<2x128xf32, #tpu.memory_space<vmem>>, vector<2x128xf32>,
    } else {
    }
    %c0_i32_6 = arith.constant 0 : i32
    %9 = arith.cmpi eq, %arg1, %c0_i32_6 : i32
    %10 = arith.extui %9 : i1 to i32
    %c0_i32_7 = arith.constant 0 : i32
    %11 = arith.cmpi ne, %10, %c0_i32_7 : i32
    scf.if %11 {
      %c0_8 = arith.constant 0 : index
      %c0_9 = arith.constant 0 : index
      %12 = vector.load %arg6[%c0_8, %c0_9] : memref<2x128xf32, #tpu.memory_space<vmem>>, vector<2x128xf32>
      %c0_10 = arith.constant 0 : index
      %c0_11 = arith.constant 0 : index
      %13 = vector.load %arg5[%c0_10, %c0_11] : memref<1x128xf32, #tpu.memory_space<vmem>>, vector<1x128xf32>
      %14 = vector.broadcast %13 : vector<1x128xf32> to vector<2x128xf32>
      %15 = arith.mulf %12, %14 : vector<2x128xf32>
      %c0_12 = arith.constant 0 : index
      %c0_13 = arith.constant 0 : index
      %16 = vector.load %arg4[%c0_12, %c0_13] : memref<1x128xf32, #tpu.memory_space<vmem>>, vector<1x128xf32>
      %17 = vector.broadcast %16 : vector<1x128xf32> to vector<2x128xf32>
      %18 = arith.addf %15, %17 : vector<2x128xf32>
      %cst_14 = arith.constant dense<0xFF800000> : vector<2xf32>
      %19 = vector.multi_reduction <maximumf>, %18, %cst_14 [1] : vector<2x128xf32> to vector<2xf32>
      %20 = vector.shape_cast %19 : vector<2xf32> to vector<2x1xf32>
      %21 = vector.broadcast %20 : vector<2x1xf32> to vector<2x128xf32>
      %22 = arith.subf %18, %21 : vector<2x128xf32>
      %23 = math.exp %22 : vector<2x128xf32>
      %cst_15 = arith.constant dense<0.000000e+00> : vector<2xf32>
      %24 = vector.multi_reduction <add>, %23, %cst_15 [1] : vector<2x128xf32> to vector<2xf32>
      %25 = vector.shape_cast %24 : vector<2xf32> to vector<2x1xf32>
      %26 = tpu.reciprocal %25 {approx = true} : vector<2x1xf32> -> vector<2x1xf32>
      %27 = vector.broadcast %26 : vector<2x1xf32> to vector<2x128xf32>
      %28 = arith.mulf %23, %27 : vector<2x128xf32>
      %c0_16 = arith.constant 0 : index
      %c0_17 = arith.constant 0 : index
      %29 = vector.load %arg6[%c0_16, %c0_17] : memref<2x128xf32, #tpu.memory_space<vmem>>, vector<2x128xf32>
      tpu.vector_store %arg6[%c0_16, %c0_17], %28 {strides = array<i32>} : memref<2x128xf32, #tpu.memory_space<vmem>>, vector<2x128xf32>,
    } else {
    }
    return
  }
  func.func @transform_0(%arg0: i32, %arg1: i32) -> (i32, i32) {
    %c0_i32 = arith.constant 0 : i32
    return %arg0, %arg1 : i32, i32
  }
  func.func @transform_1(%arg0: i32, %arg1: i32) -> (i32, i32) {
    %c0_i32 = arith.constant 0 : i32
    %c0_i32_0 = arith.constant 0 : i32
    return %arg1, %c0_i32 : i32, i32
  }
  func.func @transform_2(%arg0: i32, %arg1: i32) -> (i32, i32) {
    %c0_i32 = arith.constant 0 : i32
    %c0_i32_0 = arith.constant 0 : i32
    %c0_i32_1 = arith.constant 0 : i32
    return %c0_i32, %c0_i32_0 : i32, i32
  }
  func.func @transform_3(%arg0: i32, %arg1: i32) -> (i32, i32) {
    %c0_i32 = arith.constant 0 : i32
    %c0_i32_0 = arith.constant 0 : i32
    %c0_i32_1 = arith.constant 0 : i32
    return %c0_i32, %c0_i32_0 : i32, i32
  }
  func.func @transform_4(%arg0: i32, %arg1: i32) -> (i32, i32) {
    %c0_i32 = arith.constant 0 : i32
    %c0_i32_0 = arith.constant 0 : i32
    return %arg0, %c0_i32 : i32, i32
  }
}

</mosaic_0001>

<llo_original>
// kernel: tpu_custom_call.1
$region0: #{tpu_custom_call.1}
  #allocation0 [shape = 'u32[]', space=smem, size = 0x4, offset = 0x4, fixed_abs, tag = 'smem constant byte address 0x4 - core index']
  #allocation1 [shape = 'u32[144,128]{1,0:T(1,128)}', space=vmem, size = 0x12000, scoped, tag = 'internal scratch']
  %s0 = inlined_call_operand.hbm [shape: f32[2,1024], index: 0, kind: input, shape index: {}]
  %s1 = inlined_call_operand.hbm [shape: f32[1024,128], index: 1, kind: input, shape index: {}]
  %s2 = inlined_call_operand.vmem [shape: f32[1,128], index: 2, kind: input, shape index: {}]
  %s3 = inlined_call_operand.vmem [shape: f32[1,128], index: 3, kind: input, shape index: {}]
  %s4 = inlined_call_operand.hbm [shape: f32[2,128], index: 4, kind: output, shape index: {}]
  %s5 = sld [smem:[#allocation0]]
  $region46: #{tpu_custom_call.1} parent=0
    _
  %s7 = ssub.s32 1, %s5
  %s8 = scalar_select 0, %s7, %s5
  $region1: #{tpu_custom_call.1} parent=0
    #allocation2 [shape = 'u8[8192]{0}', space=vmem, size = 0x2000, scoped, tag = 'input window, operand 0, single buffered']
    #allocation3 [shape = 's32[1]{0}', space=sflag, size = 0x4, scoped, tag = 'scoped memory for tpu_custom_call.1']
    #allocation4 [shape = 's32[1]{0}', space=sflag, size = 0x4, scoped, tag = 'scoped memory for tpu_custom_call.1']
    #allocation5 [shape = 'u8[524288]{0}', space=vmem, size = 0x80000, scoped, tag = 'input window, operand 1, single buffered']
    #allocation6 [shape = 's32[1]{0}', space=sflag, size = 0x4, scoped, tag = 'scoped memory for tpu_custom_call.1']
    #allocation7 [shape = 'u8[1024]{0}', space=vmem, size = 0x400, scoped, tag = 'output window, operand 0, single buffered']
    %9 = vsyncpa [#allocation3], 0
    %10 = vsyncpa [#allocation6], 0
    %11 = vsyncpa [#allocation4], 0
    // Predicated region
    $region2: #{tpu_custom_call.1} parent=1 // pred_check
      _
    $region3: #{tpu_custom_call.1} parent=1 // pred_check_branch
      %13 = sbr.rel (0) target = $region5
    $region4: #{tpu_custom_call.1} parent=1 // pred_region
      %s15 = ssub.s32 256, 256
      %16 = vsyncadd [#allocation3], %s15
      %s18 = sshll.u32 [#allocation2], 4
      %s19 = int_to_ptr.vmem [resolvable:$true] %s18
      %21 = dma.hbm_to_vmem [thread:$0]  %s0, 256, %s19, [#allocation3]
    $region5: #{tpu_custom_call.1} parent=1 // pred_fallthru
      _
    // Predicated region
    $region6: #{tpu_custom_call.1} parent=1 // pred_check
      _
    $region7: #{tpu_custom_call.1} parent=1 // pred_check_branch
      %23 = sbr.rel (0) target = $region9
    $region8: #{tpu_custom_call.1} parent=1 // pred_region
      %s25 = ssub.s32 16384, 16384
      %26 = vsyncadd [#allocation6], %s25
      %s27 = sshll.u32 [#allocation5], 4
      %s28 = int_to_ptr.vmem [resolvable:$true] %s27
      %33 = dma.hbm_to_vmem [thread:$0]  %s1, 16384, %s28, [#allocation6], 128, 128, 8
    $region9: #{tpu_custom_call.1} parent=1 // pred_fallthru
      _
    // Predicated region
    $region10: #{tpu_custom_call.1} parent=1 // pred_check
      _
    $region11: #{tpu_custom_call.1} parent=1 // pred_check_branch
      %35 = sbr.rel (0) target = $region13
    $region12: #{tpu_custom_call.1} parent=1 // pred_region
      _
    $region13: #{tpu_custom_call.1} parent=1 // pred_fallthru
      _
    // Predicated region
    $region14: #{tpu_custom_call.1} parent=1 // pred_check
      _
    $region15: #{tpu_custom_call.1} parent=1 // pred_check_branch
      %37 = sbr.rel (0) target = $region17
    $region16: #{tpu_custom_call.1} parent=1 // pred_region
      _
    $region17: #{tpu_custom_call.1} parent=1 // pred_fallthru
      _
    // Predicated region
    $region18: #{tpu_custom_call.1} parent=1 // pred_check
      _
    $region19: #{tpu_custom_call.1} parent=1 // pred_check_branch
      %39 = sbr.rel (0) target = $region21
    $region20: #{tpu_custom_call.1} parent=1 // pred_region
      %40 = dma.done [#allocation3], 256
    $region21: #{tpu_custom_call.1} parent=1 // pred_fallthru
      _
    // Predicated region
    $region22: #{tpu_custom_call.1} parent=1 // pred_check
      _
    $region23: #{tpu_custom_call.1} parent=1 // pred_check_branch
      %42 = sbr.rel (0) target = $region25
    $region24: #{tpu_custom_call.1} parent=1 // pred_region
      %43 = dma.done [#allocation6], 16384
    $region25: #{tpu_custom_call.1} parent=1 // pred_fallthru
      _
    %v44 = vld [vmem:[#allocation2] sm:$0xff]
    %v45 = vld [vmem:[#allocation2 + $0x8] sm:$0xff]
    %v46 = vld [vmem:[#allocation5] sm:$0xff]
    %v47 = vld [vmem:[#allocation5 + $0x8] sm:$0xff]
    %v48 = vld [vmem:[#allocation5 + $0x10] sm:$0xff]
    %v49 = vld [vmem:[#allocation5 + $0x18] sm:$0xff]
    %v50 = vld [vmem:[#allocation5 + $0x20] sm:$0xff]
    %v51 = vld [vmem:[#allocation5 + $0x28] sm:$0xff]
    %v52 = vld [vmem:[#allocation5 + $0x30] sm:$0xff]
    %v53 = vld [vmem:[#allocation5 + $0x38] sm:$0xff]
    %v54 = vld [vmem:[#allocation5 + $0x40] sm:$0xff]
    %v55 = vld [vmem:[#allocation5 + $0x48] sm:$0xff]
    %v56 = vld [vmem:[#allocation5 + $0x50] sm:$0xff]
    %v57 = vld [vmem:[#allocation5 + $0x58] sm:$0xff]
    %v58 = vld [vmem:[#allocation5 + $0x60] sm:$0xff]
    %v59 = vld [vmem:[#allocation5 + $0x68] sm:$0xff]
    %v60 = vld [vmem:[#allocation5 + $0x70] sm:$0xff]
    %v61 = vld [vmem:[#allocation5 + $0x78] sm:$0xff]
    %v62 = vld [vmem:[#allocation5 + $0x80] sm:$0xff]
    %v63 = vld [vmem:[#allocation5 + $0x88] sm:$0xff]
    %v64 = vld [vmem:[#allocation5 + $0x90] sm:$0xff]
    %v65 = vld [vmem:[#allocation5 + $0x98] sm:$0xff]
    %v66 = vld [vmem:[#allocation5 + $0xa0] sm:$0xff]
    %v67 = vld [vmem:[#allocation5 + $0xa8] sm:$0xff]
    %v68 = vld [vmem:[#allocation5 + $0xb0] sm:$0xff]
    %v69 = vld [vmem:[#allocation5 + $0xb8] sm:$0xff]
    %v70 = vld [vmem:[#allocation5 + $0xc0] sm:$0xff]
    %v71 = vld [vmem:[#allocation5 + $0xc8] sm:$0xff]
    %v72 = vld [vmem:[#allocation5 + $0xd0] sm:$0xff]
    %v73 = vld [vmem:[#allocation5 + $0xd8] sm:$0xff]
    %v74 = vld [vmem:[#allocation5 + $0xe0] sm:$0xff]
    %v75 = vld [vmem:[#allocation5 + $0xe8] sm:$0xff]
    %v76 = vld [vmem:[#allocation5 + $0xf0] sm:$0xff]
    %v77 = vld [vmem:[#allocation5 + $0xf8] sm:$0xff]
    %v78 = vld [vmem:[#allocation5 + $0x100] sm:$0xff]
    %v79 = vld [vmem:[#allocation5 + $0x108] sm:$0xff]
    %v80 = vld [vmem:[#allocation5 + $0x110] sm:$0xff]
    %v81 = vld [vmem:[#allocation5 + $0x118] sm:$0xff]
    %v82 = vld [vmem:[#allocation5 + $0x120] sm:$0xff]
    %v83 = vld [vmem:[#allocation5 + $0x128] sm:$0xff]
    %v84 = vld [vmem:[#allocation5 + $0x130] sm:$0xff]
    %v85 = vld [vmem:[#allocation5 + $0x138] sm:$0xff]
    %v86 = vld [vmem:[#allocation5 + $0x140] sm:$0xff]
    %v87 = vld [vmem:[#allocation5 + $0x148] sm:$0xff]
    %v88 = vld [vmem:[#allocation5 + $0x150] sm:$0xff]
    %v89 = vld [vmem:[#allocation5 + $0x158] sm:$0xff]
    %v90 = vld [vmem:[#allocation5 + $0x160] sm:$0xff]
    %v91 = vld [vmem:[#allocation5 + $0x168] sm:$0xff]
    %v92 = vld [vmem:[#allocation5 + $0x170] sm:$0xff]
    %v93 = vld [vmem:[#allocation5 + $0x178] sm:$0xff]
    %v94 = vld [vmem:[#allocation5 + $0x180] sm:$0xff]
    %v95 = vld [vmem:[#allocation5 + $0x188] sm:$0xff]
    %v96 = vld [vmem:[#allocation5 + $0x190] sm:$0xff]
    %v97 = vld [vmem:[#allocation5 + $0x198] sm:$0xff]
    %v98 = vld [vmem:[#allocation5 + $0x1a0] sm:$0xff]
    %v99 = vld [vmem:[#allocation5 + $0x1a8] sm:$0xff]
    %v100 = vld [vmem:[#allocation5 + $0x1b0] sm:$0xff]
    %v101 = vld [vmem:[#allocation5 + $0x1b8] sm:$0xff]
    %v102 = vld [vmem:[#allocation5 + $0x1c0] sm:$0xff]
    %v103 = vld [vmem:[#allocation5 + $0x1c8] sm:$0xff]
    %v104 = vld [vmem:[#allocation5 + $0x1d0] sm:$0xff]
    %v105 = vld [vmem:[#allocation5 + $0x1d8] sm:$0xff]
    %v106 = vld [vmem:[#allocation5 + $0x1e0] sm:$0xff]
    %v107 = vld [vmem:[#allocation5 + $0x1e8] sm:$0xff]
    %v108 = vld [vmem:[#allocation5 + $0x1f0] sm:$0xff]
    %v109 = vld [vmem:[#allocation5 + $0x1f8] sm:$0xff]
    %v110 = vld [vmem:[#allocation5 + $0x200] sm:$0xff]
    %v111 = vld [vmem:[#allocation5 + $0x208] sm:$0xff]
    %v112 = vld [vmem:[#allocation5 + $0x210] sm:$0xff]
    %v113 = vld [vmem:[#allocation5 + $0x218] sm:$0xff]
    %v114 = vld [vmem:[#allocation5 + $0x220] sm:$0xff]
    %v115 = vld [vmem:[#allocation5 + $0x228] sm:$0xff]
    %v116 = vld [vmem:[#allocation5 + $0x230] sm:$0xff]
    %v117 = vld [vmem:[#allocation5 + $0x238] sm:$0xff]
    %v118 = vld [vmem:[#allocation5 + $0x240] sm:$0xff]
    %v119 = vld [vmem:[#allocation5 + $0x248] sm:$0xff]
    %v120 = vld [vmem:[#allocation5 + $0x250] sm:$0xff]
    %v121 = vld [vmem:[#allocation5 + $0x258] sm:$0xff]
    %v122 = vld [vmem:[#allocation5 + $0x260] sm:$0xff]
    %v123 = vld [vmem:[#allocation5 + $0x268] sm:$0xff]
    %v124 = vld [vmem:[#allocation5 + $0x270] sm:$0xff]
    %v125 = vld [vmem:[#allocation5 + $0x278] sm:$0xff]
    %v126 = vld [vmem:[#allocation5 + $0x280] sm:$0xff]
    %v127 = vld [vmem:[#allocation5 + $0x288] sm:$0xff]
    %v128 = vld [vmem:[#allocation5 + $0x290] sm:$0xff]
    %v129 = vld [vmem:[#allocation5 + $0x298] sm:$0xff]
    %v130 = vld [vmem:[#allocation5 + $0x2a0] sm:$0xff]
    %v131 = vld [vmem:[#allocation5 + $0x2a8] sm:$0xff]
    %v132 = vld [vmem:[#allocation5 + $0x2b0] sm:$0xff]
    %v133 = vld [vmem:[#allocation5 + $0x2b8] sm:$0xff]
    %v134 = vld [vmem:[#allocation5 + $0x2c0] sm:$0xff]
    %v135 = vld [vmem:[#allocation5 + $0x2c8] sm:$0xff]
    %v136 = vld [vmem:[#allocation5 + $0x2d0] sm:$0xff]
    %v137 = vld [vmem:[#allocation5 + $0x2d8] sm:$0xff]
    %v138 = vld [vmem:[#allocation5 + $0x2e0] sm:$0xff]
    %v139 = vld [vmem:[#allocation5 + $0x2e8] sm:$0xff]
    %v140 = vld [vmem:[#allocation5 + $0x2f0] sm:$0xff]
    %v141 = vld [vmem:[#allocation5 + $0x2f8] sm:$0xff]
    %v142 = vld [vmem:[#allocation5 + $0x300] sm:$0xff]
    %v143 = vld [vmem:[#allocation5 + $0x308] sm:$0xff]
    %v144 = vld [vmem:[#allocation5 + $0x310] sm:$0xff]
    %v145 = vld [vmem:[#allocation5 + $0x318] sm:$0xff]
    %v146 = vld [vmem:[#allocation5 + $0x320] sm:$0xff]
    %v147 = vld [vmem:[#allocation5 + $0x328] sm:$0xff]
    %v148 = vld [vmem:[#allocation5 + $0x330] sm:$0xff]
    %v149 = vld [vmem:[#allocation5 + $0x338] sm:$0xff]
    %v150 = vld [vmem:[#allocation5 + $0x340] sm:$0xff]
    %v151 = vld [vmem:[#allocation5 + $0x348] sm:$0xff]
    %v152 = vld [vmem:[#allocation5 + $0x350] sm:$0xff]
    %v153 = vld [vmem:[#allocation5 + $0x358] sm:$0xff]
    %v154 = vld [vmem:[#allocation5 + $0x360] sm:$0xff]
    %v155 = vld [vmem:[#allocation5 + $0x368] sm:$0xff]
    %v156 = vld [vmem:[#allocation5 + $0x370] sm:$0xff]
    %v157 = vld [vmem:[#allocation5 + $0x378] sm:$0xff]
    %v158 = vld [vmem:[#allocation5 + $0x380] sm:$0xff]
    %v159 = vld [vmem:[#allocation5 + $0x388] sm:$0xff]
    %v160 = vld [vmem:[#allocation5 + $0x390] sm:$0xff]
    %v161 = vld [vmem:[#allocation5 + $0x398] sm:$0xff]
    %v162 = vld [vmem:[#allocation5 + $0x3a0] sm:$0xff]
    %v163 = vld [vmem:[#allocation5 + $0x3a8] sm:$0xff]
    %v164 = vld [vmem:[#allocation5 + $0x3b0] sm:$0xff]
    %v165 = vld [vmem:[#allocation5 + $0x3b8] sm:$0xff]
    %v166 = vld [vmem:[#allocation5 + $0x3c0] sm:$0xff]
    %v167 = vld [vmem:[#allocation5 + $0x3c8] sm:$0xff]
    %v168 = vld [vmem:[#allocation5 + $0x3d0] sm:$0xff]
    %v169 = vld [vmem:[#allocation5 + $0x3d8] sm:$0xff]
    %v170 = vld [vmem:[#allocation5 + $0x3e0] sm:$0xff]
    %v171 = vld [vmem:[#allocation5 + $0x3e8] sm:$0xff]
    %v172 = vld [vmem:[#allocation5 + $0x3f0] sm:$0xff]
    %v173 = vld [vmem:[#allocation5 + $0x3f8] sm:$0xff]
    %v176 = vcombine.high %v44, %v44
    %v178 = vunpack.c.l.s4 1983009808
    %v179 = vunpack.c.0.s8 %v178
    %v180 = vlaneseq
    %v181 = vshrl.u32 %v180, 7
    %v182 = vsub.s32 %v179, %v181
    %v183 = vrot.slane %v44, %v182
    %v185 = vunpack.c.l.s4 1983009808
    %v186 = vunpack.c.0.s8 %v185
    %v187 = vlaneseq
    %v188 = vshrl.u32 %v187, 7
    %v189 = vsub.s32 %v186, %v188
    %v190 = vrot.slane %v176, %v189
    %v191 = vcombine.high %v183, %v183
    %v192 = vcombine.high %v190, %v190
    %v193 = vcombine.high %v45, %v45
    %v195 = vunpack.c.l.s4 1983009808
    %v196 = vunpack.c.0.s8 %v195
    %v197 = vlaneseq
    %v198 = vshrl.u32 %v197, 7
    %v199 = vsub.s32 %v196, %v198
    %v200 = vrot.slane %v45, %v199
    %v202 = vunpack.c.l.s4 1983009808
    %v203 = vunpack.c.0.s8 %v202
    %v204 = vlaneseq
    %v205 = vshrl.u32 %v204, 7
    %v206 = vsub.s32 %v203, %v205
    %v207 = vrot.slane %v193, %v206
    %v208 = vcombine.high %v200, %v200
    %v209 = vcombine.high %v207, %v207
    %218 = vmatprep.subr.mxu0 0.0
    %219 = vmatpush1.msra.mxu0 %v61
    %220 = vmatprep.subr.mxu0 0.0
    %221 = vmatpush1.msra.mxu0 %v60
    %222 = vmatprep.subr.mxu0 0.0
    %223 = vmatpush1.msra.mxu0 %v59
    %224 = vmatprep.subr.mxu0 0.0
    %225 = vmatpush1.msra.mxu0 %v58
    %226 = vmatprep.subr.mxu0 0.0
    %227 = vmatpush1.msra.mxu0 %v57
    %228 = vmatprep.subr.mxu0 0.0
    %229 = vmatpush1.msra.mxu0 %v56
    %230 = vmatprep.subr.mxu0 0.0
    %231 = vmatpush1.msra.mxu0 %v55
    %232 = vmatprep.subr.mxu0 0.0
    %233 = vmatpush1.msra.mxu0 %v54
    %234 = vmatprep.subr.mxu0 0.0
    %235 = vmatpush1.msra.mxu0 %v53
    %236 = vmatprep.subr.mxu0 0.0
    %237 = vmatpush1.msra.mxu0 %v52
    %238 = vmatprep.subr.mxu0 0.0
    %239 = vmatpush1.msra.mxu0 %v51
    %240 = vmatprep.subr.mxu0 0.0
    %241 = vmatpush1.msra.mxu0 %v50
    %242 = vmatprep.subr.mxu0 0.0
    %243 = vmatpush1.msra.mxu0 %v49
    %244 = vmatprep.subr.mxu0 0.0
    %245 = vmatpush1.msra.mxu0 %v48
    %246 = vmatprep.subr.mxu0 0.0
    %247 = vmatpush1.msra.mxu0 %v47
    %248 = vmatprep.subr.mxu0 0.0
    %249 = vmatpush1.msra.mxu0 %v46
    %250 = vmatprep.subr.mxu0 0.0
    %251 = vmatpush2.msra.mxu0 %v77
    %252 = vmatprep.subr.mxu0 0.0
    %253 = vmatpush2.msra.mxu0 %v76
    %254 = vmatprep.subr.mxu0 0.0
    %255 = vmatpush2.msra.mxu0 %v75
    %256 = vmatprep.subr.mxu0 0.0
    %257 = vmatpush2.msra.mxu0 %v74
    %258 = vmatprep.subr.mxu0 0.0
    %259 = vmatpush2.msra.mxu0 %v73
    %260 = vmatprep.subr.mxu0 0.0
    %261 = vmatpush2.msra.mxu0 %v72
    %262 = vmatprep.subr.mxu0 0.0
    %263 = vmatpush2.msra.mxu0 %v71
    %264 = vmatprep.subr.mxu0 0.0
    %265 = vmatpush2.msra.mxu0 %v70
    %266 = vmatprep.subr.mxu0 0.0
    %267 = vmatpush2.msra.mxu0 %v69
    %268 = vmatprep.subr.mxu0 0.0
    %269 = vmatpush2.msra.mxu0 %v68
    %270 = vmatprep.subr.mxu0 0.0
    %271 = vmatpush2.msra.mxu0 %v67
    %272 = vmatprep.subr.mxu0 0.0
    %273 = vmatpush2.msra.mxu0 %v66
    %274 = vmatprep.subr.mxu0 0.0
    %275 = vmatpush2.msra.mxu0 %v65
    %276 = vmatprep.subr.mxu0 0.0
    %277 = vmatpush2.msra.mxu0 %v64
    %278 = vmatprep.subr.mxu0 0.0
    %279 = vmatpush2.msra.mxu0 %v63
    %280 = vmatprep.subr.mxu0 0.0
    %281 = vmatpush2.msra.mxu0 %v62
    %282 = vmatprep.mubr.f32.mxu0 %v191
    %283 = vmatmul.mubr.f32.gmra.mxu0 %v183
    %v284 = vpop.f32.mrf.mxu0
    %v285 = vadd.f32 0.0, %v284
    %v286 = vpop.f32.mrf.mxu0
    %287 = vdwg.mxu0
    %288 = vmatprep.subr.mxu0 0.0
    %289 = vmatpush1.msra.mxu0 %v93
    %290 = vmatprep.subr.mxu0 0.0
    %291 = vmatpush1.msra.mxu0 %v92
    %292 = vmatprep.subr.mxu0 0.0
    %293 = vmatpush1.msra.mxu0 %v91
    %294 = vmatprep.subr.mxu0 0.0
    %295 = vmatpush1.msra.mxu0 %v90
    %296 = vmatprep.subr.mxu0 0.0
    %297 = vmatpush1.msra.mxu0 %v89
    %298 = vmatprep.subr.mxu0 0.0
    %299 = vmatpush1.msra.mxu0 %v88
    %300 = vmatprep.subr.mxu0 0.0
    %301 = vmatpush1.msra.mxu0 %v87
    %302 = vmatprep.subr.mxu0 0.0
    %303 = vmatpush1.msra.mxu0 %v86
    %304 = vmatprep.subr.mxu0 0.0
    %305 = vmatpush1.msra.mxu0 %v85
    %306 = vmatprep.subr.mxu0 0.0
    %307 = vmatpush1.msra.mxu0 %v84
    %308 = vmatprep.subr.mxu0 0.0
    %309 = vmatpush1.msra.mxu0 %v83
    %310 = vmatprep.subr.mxu0 0.0
    %311 = vmatpush1.msra.mxu0 %v82
    %312 = vmatprep.subr.mxu0 0.0
    %313 = vmatpush1.msra.mxu0 %v81
    %314 = vmatprep.subr.mxu0 0.0
    %315 = vmatpush1.msra.mxu0 %v80
    %316 = vmatprep.subr.mxu0 0.0
    %317 = vmatpush1.msra.mxu0 %v79
    %318 = vmatprep.subr.mxu0 0.0
    %319 = vmatpush1.msra.mxu0 %v78
    %320 = vmatprep.subr.mxu0 0.0
    %321 = vmatpush2.msra.mxu0 %v109
    %322 = vmatprep.subr.mxu0 0.0
    %323 = vmatpush2.msra.mxu0 %v108
    %324 = vmatprep.subr.mxu0 0.0
    %325 = vmatpush2.msra.mxu0 %v107
    %326 = vmatprep.subr.mxu0 0.0
    %327 = vmatpush2.msra.mxu0 %v106
    %328 = vmatprep.subr.mxu0 0.0
    %329 = vmatpush2.msra.mxu0 %v105
    %330 = vmatprep.subr.mxu0 0.0
    %331 = vmatpush2.msra.mxu0 %v104
    %332 = vmatprep.subr.mxu0 0.0
    %333 = vmatpush2.msra.mxu0 %v103
    %334 = vmatprep.subr.mxu0 0.0
    %335 = vmatpush2.msra.mxu0 %v102
    %336 = vmatprep.subr.mxu0 0.0
    %337 = vmatpush2.msra.mxu0 %v101
    %338 = vmatprep.subr.mxu0 0.0
    %339 = vmatpush2.msra.mxu0 %v100
    %340 = vmatprep.subr.mxu0 0.0
    %341 = vmatpush2.msra.mxu0 %v99
    %342 = vmatprep.subr.mxu0 0.0
    %343 = vmatpush2.msra.mxu0 %v98
    %344 = vmatprep.subr.mxu0 0.0
    %345 = vmatpush2.msra.mxu0 %v97
    %346 = vmatprep.subr.mxu0 0.0
    %347 = vmatpush2.msra.mxu0 %v96
    %348 = vmatprep.subr.mxu0 0.0
    %349 = vmatpush2.msra.mxu0 %v95
    %350 = vmatprep.subr.mxu0 0.0
    %351 = vmatpush2.msra.mxu0 %v94
    %352 = vmatprep.mubr.f32.mxu0 %v192
    %353 = vmatmul.mubr.f32.gmra.mxu0 %v190
    %v354 = vpop.f32.mrf.mxu0
    %v355 = vadd.f32 %v285, %v354
    %v356 = vpop.f32.mrf.mxu0
    %357 = vdwg.mxu0
    %358 = vmatprep.subr.mxu0 0.0
    %359 = vmatpush1.msra.mxu0 %v125
    %360 = vmatprep.subr.mxu0 0.0
    %361 = vmatpush1.msra.mxu0 %v124
    %362 = vmatprep.subr.mxu0 0.0
    %363 = vmatpush1.msra.mxu0 %v123
    %364 = vmatprep.subr.mxu0 0.0
    %365 = vmatpush1.msra.mxu0 %v122
    %366 = vmatprep.subr.mxu0 0.0
    %367 = vmatpush1.msra.mxu0 %v121
    %368 = vmatprep.subr.mxu0 0.0
    %369 = vmatpush1.msra.mxu0 %v120
    %370 = vmatprep.subr.mxu0 0.0
    %371 = vmatpush1.msra.mxu0 %v119
    %372 = vmatprep.subr.mxu0 0.0
    %373 = vmatpush1.msra.mxu0 %v118
    %374 = vmatprep.subr.mxu0 0.0
    %375 = vmatpush1.msra.mxu0 %v117
    %376 = vmatprep.subr.mxu0 0.0
    %377 = vmatpush1.msra.mxu0 %v116
    %378 = vmatprep.subr.mxu0 0.0
    %379 = vmatpush1.msra.mxu0 %v115
    %380 = vmatprep.subr.mxu0 0.0
    %381 = vmatpush1.msra.mxu0 %v114
    %382 = vmatprep.subr.mxu0 0.0
    %383 = vmatpush1.msra.mxu0 %v113
    %384 = vmatprep.subr.mxu0 0.0
    %385 = vmatpush1.msra.mxu0 %v112
    %386 = vmatprep.subr.mxu0 0.0
    %387 = vmatpush1.msra.mxu0 %v111
    %388 = vmatprep.subr.mxu0 0.0
    %389 = vmatpush1.msra.mxu0 %v110
    %390 = vmatprep.subr.mxu0 0.0
    %391 = vmatpush2.msra.mxu0 %v141
    %392 = vmatprep.subr.mxu0 0.0
    %393 = vmatpush2.msra.mxu0 %v140
    %394 = vmatprep.subr.mxu0 0.0
    %395 = vmatpush2.msra.mxu0 %v139
    %396 = vmatprep.subr.mxu0 0.0
    %397 = vmatpush2.msra.mxu0 %v138
    %398 = vmatprep.subr.mxu0 0.0
    %399 = vmatpush2.msra.mxu0 %v137
    %400 = vmatprep.subr.mxu0 0.0
    %401 = vmatpush2.msra.mxu0 %v136
    %402 = vmatprep.subr.mxu0 0.0
    %403 = vmatpush2.msra.mxu0 %v135
    %404 = vmatprep.subr.mxu0 0.0
    %405 = vmatpush2.msra.mxu0 %v134
    %406 = vmatprep.subr.mxu0 0.0
    %407 = vmatpush2.msra.mxu0 %v133
    %408 = vmatprep.subr.mxu0 0.0
    %409 = vmatpush2.msra.mxu0 %v132
    %410 = vmatprep.subr.mxu0 0.0
    %411 = vmatpush2.msra.mxu0 %v131
    %412 = vmatprep.subr.mxu0 0.0
    %413 = vmatpush2.msra.mxu0 %v130
    %414 = vmatprep.subr.mxu0 0.0
    %415 = vmatpush2.msra.mxu0 %v129
    %416 = vmatprep.subr.mxu0 0.0
    %417 = vmatpush2.msra.mxu0 %v128
    %418 = vmatprep.subr.mxu0 0.0
    %419 = vmatpush2.msra.mxu0 %v127
    %420 = vmatprep.subr.mxu0 0.0
    %421 = vmatpush2.msra.mxu0 %v126
    %422 = vmatprep.mubr.f32.mxu0 %v208
    %423 = vmatmul.mubr.f32.gmra.mxu0 %v200
    %v424 = vpop.f32.mrf.mxu0
    %v425 = vadd.f32 %v355, %v424
    %v426 = vpop.f32.mrf.mxu0
    %427 = vdwg.mxu0
    %428 = vmatprep.subr.mxu0 0.0
    %429 = vmatpush1.msra.mxu0 %v157
    %430 = vmatprep.subr.mxu0 0.0
    %431 = vmatpush1.msra.mxu0 %v156
    %432 = vmatprep.subr.mxu0 0.0
    %433 = vmatpush1.msra.mxu0 %v155
    %434 = vmatprep.subr.mxu0 0.0
    %435 = vmatpush1.msra.mxu0 %v154
    %436 = vmatprep.subr.mxu0 0.0
    %437 = vmatpush1.msra.mxu0 %v153
    %438 = vmatprep.subr.mxu0 0.0
    %439 = vmatpush1.msra.mxu0 %v152
    %440 = vmatprep.subr.mxu0 0.0
    %441 = vmatpush1.msra.mxu0 %v151
    %442 = vmatprep.subr.mxu0 0.0
    %443 = vmatpush1.msra.mxu0 %v150
    %444 = vmatprep.subr.mxu0 0.0
    %445 = vmatpush1.msra.mxu0 %v149
    %446 = vmatprep.subr.mxu0 0.0
    %447 = vmatpush1.msra.mxu0 %v148
    %448 = vmatprep.subr.mxu0 0.0
    %449 = vmatpush1.msra.mxu0 %v147
    %450 = vmatprep.subr.mxu0 0.0
    %451 = vmatpush1.msra.mxu0 %v146
    %452 = vmatprep.subr.mxu0 0.0
    %453 = vmatpush1.msra.mxu0 %v145
    %454 = vmatprep.subr.mxu0 0.0
    %455 = vmatpush1.msra.mxu0 %v144
    %456 = vmatprep.subr.mxu0 0.0
    %457 = vmatpush1.msra.mxu0 %v143
    %458 = vmatprep.subr.mxu0 0.0
    %459 = vmatpush1.msra.mxu0 %v142
    %460 = vmatprep.subr.mxu0 0.0
    %461 = vmatpush2.msra.mxu0 %v173
    %462 = vmatprep.subr.mxu0 0.0
    %463 = vmatpush2.msra.mxu0 %v172
    %464 = vmatprep.subr.mxu0 0.0
    %465 = vmatpush2.msra.mxu0 %v171
    %466 = vmatprep.subr.mxu0 0.0
    %467 = vmatpush2.msra.mxu0 %v170
    %468 = vmatprep.subr.mxu0 0.0
    %469 = vmatpush2.msra.mxu0 %v169
    %470 = vmatprep.subr.mxu0 0.0
    %471 = vmatpush2.msra.mxu0 %v168
    %472 = vmatprep.subr.mxu0 0.0
    %473 = vmatpush2.msra.mxu0 %v167
    %474 = vmatprep.subr.mxu0 0.0
    %475 = vmatpush2.msra.mxu0 %v166
    %476 = vmatprep.subr.mxu0 0.0
    %477 = vmatpush2.msra.mxu0 %v165
    %478 = vmatprep.subr.mxu0 0.0
    %479 = vmatpush2.msra.mxu0 %v164
    %480 = vmatprep.subr.mxu0 0.0
    %481 = vmatpush2.msra.mxu0 %v163
    %482 = vmatprep.subr.mxu0 0.0
    %483 = vmatpush2.msra.mxu0 %v162
    %484 = vmatprep.subr.mxu0 0.0
    %485 = vmatpush2.msra.mxu0 %v161
    %486 = vmatprep.subr.mxu0 0.0
    %487 = vmatpush2.msra.mxu0 %v160
    %488 = vmatprep.subr.mxu0 0.0
    %489 = vmatpush2.msra.mxu0 %v159
    %490 = vmatprep.subr.mxu0 0.0
    %491 = vmatpush2.msra.mxu0 %v158
    %492 = vmatprep.mubr.f32.mxu0 %v209
    %493 = vmatmul.mubr.f32.gmra.mxu0 %v207
    %v494 = vpop.f32.mrf.mxu0
    %v495 = vadd.f32 %v425, %v494
    %v496 = vpop.f32.mrf.mxu0
    %497 = vdwg.mxu0
    %p498 = scmp.eq.s32.totalorder 0, 0
    // Predicated region
    $region26: #{tpu_custom_call.1} parent=1 // pred_check
      %p499 = pneg %p498
    $region27: #{tpu_custom_call.1} parent=1 // pred_check_branch
      %501 = sbr.rel (%p499) target = $region29
    $region28: #{tpu_custom_call.1} parent=1 // pred_region
      %502 = vst [vmem:[#allocation7] sm:$0x3] %v495
    $region29: #{tpu_custom_call.1} parent=1 // pred_fallthru
      _
    %p503 = scmp.gt.s32.totalorder 0, 0
    // Predicated region
    $region30: #{tpu_custom_call.1} parent=1 // pred_check
      %p504 = pneg %p503
    $region31: #{tpu_custom_call.1} parent=1 // pred_check_branch
      %506 = sbr.rel (%p504) target = $region33
    $region32: #{tpu_custom_call.1} parent=1 // pred_region
      %v507 = vld [vmem:[#allocation7] sm:$0x3]
      %v508 = vadd.f32 %v507, %v495
      %509 = vst [vmem:[#allocation7] sm:$0x3] %v508
    $region33: #{tpu_custom_call.1} parent=1 // pred_fallthru
      _
    // Predicated region
    $region34: #{tpu_custom_call.1} parent=1 // pred_check
      %p510 = pneg %p498
    $region35: #{tpu_custom_call.1} parent=1 // pred_check_branch
      %512 = sbr.rel (%p510) target = $region37
    $region36: #{tpu_custom_call.1} parent=1 // pred_region
      %v513 = vld [vmem:[#allocation7] sm:$0x3]
      %v514 = vld [vmem:[%s3] sm:$0x1]
      %v516 = vlaneseq
      %v517 = vshrl.u32 %v516, 7
      %v518 = vsub.s32 0, %v517
      %v519 = vrot.slane %v514, %v518
      %v521 = vmul.f32 %v513, %v519
      %v522 = vld [vmem:[%s2] sm:$0x1]
      %v524 = vlaneseq
      %v525 = vshrl.u32 %v524, 7
      %v526 = vsub.s32 0, %v525
      %v527 = vrot.slane %v522, %v526
      %v529 = vadd.f32 %v521, %v527
      %vm530 = vcmask 1041408
      %v531 = vsel %vm530, %v529, -inf
      %532 = vmax.xlane.f32.xlu0 %v531
      %v533 = vpop.xlane.xlu0 %532
      %v534 = vsub.f32 %v529, %v533
      %v535 = vmul.f32 %v534, 1.442695
      %v536 = vpow.pop %v535
      %v537 = vsel %vm530, %v536, 0.0
      %538 = vadd.xlane.f32.xlu0 %v537
      %v539 = vpop.xlane.xlu0 %538
      %v540 = vrcp.pop %v539
      %v541 = vmul.f32 %v536, %v540
      %542 = vst [vmem:[#allocation7] sm:$0x3] %v541
    $region37: #{tpu_custom_call.1} parent=1 // pred_fallthru
      _
    // Predicated region
    $region38: #{tpu_custom_call.1} parent=1 // pred_check
      _
    $region39: #{tpu_custom_call.1} parent=1 // pred_check_branch
      %544 = sbr.rel (0) target = $region41
    $region40: #{tpu_custom_call.1} parent=1 // pred_region
      %s546 = ssub.s32 32, 32
      %547 = vsyncadd [#allocation4], %s546
      %s549 = sshll.u32 [#allocation7], 4
      %s550 = int_to_ptr.vmem [resolvable:$true] %s549
      %552 = dma.vmem_to_hbm [thread:$0]  %s550, 32, %s4, [#allocation4]
    $region41: #{tpu_custom_call.1} parent=1 // pred_fallthru
      _
    // Predicated region
    $region42: #{tpu_custom_call.1} parent=1 // pred_check
      _
    $region43: #{tpu_custom_call.1} parent=1 // pred_check_branch
      %554 = sbr.rel (0) target = $region45
    $region44: #{tpu_custom_call.1} parent=1 // pred_region
      %555 = dma.done [#allocation4], 32
    $region45: #{tpu_custom_call.1} parent=1 // pred_fallthru
      _
    %556 = vsyncpa [#allocation3], 1
    %557 = vsyncpa [#allocation6], 1
    %558 = vsyncpa [#allocation4], 1

</llo_original>
